<compile_context>
chip_gen: v5e
topology: v5e:2x2
jax: 0.10.0
libtpu: 0.0.40
codegen_flags: <defaults>
</compile_context>

<pallas_src>
import jax
import jax.numpy as jnp
from jax.experimental import pallas as pl
from jax.experimental.pallas import tpu as pltpu


def planar_flow_kernel(bias_ref, z_ref, wblk_ref, sblk_ref, o_ref):
    # bias_ref : SMEM (1, 1)   f32 scalar bias
    # z_ref    : VMEM (TB, Dp) packed input tile (k original rows per packed row)
    # wblk_ref : VMEM (Dp, k)  block-column weight matrix
    # sblk_ref : VMEM (k, Dp)  block-row scale matrix
    # o_ref    : VMEM (TB, Dp) packed output tile
    z = z_ref[...]                                   # native dtype (f32 or bf16)
    b = bias_ref[0, 0]

    # Per-packed-row, per-segment reduction on the (otherwise idle) MXU.
    lin = jnp.dot(z, wblk_ref[...], preferred_element_type=jnp.float32) + b   # (TB, k)
    psi = jnp.tanh(lin)                                                        # (TB, k) f32

    # Broadcast scale * psi back onto the packed layout with a second matmul.
    upd = jnp.dot(psi.astype(z.dtype), sblk_ref[...],
                  preferred_element_type=jnp.float32)                          # (TB, Dp)
    o_ref[...] = z + upd.astype(z.dtype)


def _plan_packing(D):
    """Return (D_pad, k): pad latent dim to D_pad and pack k rows per 128-lane
    packed row so the kernel last dim Dp = k * D_pad is always a multiple of 128
    (full unmasked vst stores for any D)."""
    if D % 128 == 0:
        return D, 1
    if D > 128:
        return pl.cdiv(D, 128) * 128, 1
    d_pad = 1
    while d_pad < D:                 # smallest power of two >= D (divides 128)
        d_pad *= 2
    return d_pad, 128 // d_pad


def _vmem_plan():
    """(tile-buffer budget bytes, vmem_limit_bytes) sized per TPU generation."""
    try:
        cap = int(pltpu.get_tpu_info().vmem_capacity_bytes)
    except Exception:
        cap = 64 * 1024 * 1024
    if cap >= 128 * 1024 * 1024:                       # v5e / v6e
        return 48 * 1024 * 1024, 96 * 1024 * 1024
    return 20 * 1024 * 1024, 32 * 1024 * 1024          # v7x (64 MiB) / fallback


def _choose_tile_b(Bp, Dp, itemsize, buf_budget):
    """Largest batch tile that fits the budget while guaranteeing a multi-step
    grid (double-buffering + megacore sharding) whenever there is enough work."""
    if Bp <= 8:
        return Bp                                      # single full block (legal)
    per_row = 4 * Dp * itemsize                        # double-buffered in + out
    tile_b = min(2048, max(8, buf_budget // per_row))
    total = Bp * Dp * itemsize
    if total > 2 * 1024 * 1024:
        tile_b = min(tile_b, pl.cdiv(Bp, 8))           # >= 8 grid steps
    else:
        tile_b = min(tile_b, pl.cdiv(Bp, 2))           # >= 2 grid steps
    tile_b = max(8, (tile_b // 8) * 8)                 # sublane multiple
    return min(tile_b, Bp)


def planar_flow(z, weight, scale, bias, *, tile_b=None):
    """z: (B, D), weight: (1, D), scale: (1, D), bias: (1,) -> (B, D)."""
    B, D = z.shape
    D_pad, k = _plan_packing(D)
    Dp = k * D_pad
    B_pad = pl.cdiv(B, k) * k
    Bp = B_pad // k

    # Zero padding: padded weight/scale columns are zero, so the linear term and
    # the update are unchanged; padded rows are sliced off afterwards.
    if (B_pad, D_pad) != (B, D):
        zp = jnp.pad(z, ((0, B_pad - B), (0, D_pad - D)))
    else:
        zp = z
    zp = zp.reshape(Bp, Dp)

    w_pad = jnp.pad(jnp.asarray(weight, jnp.float32), ((0, 0), (0, D_pad - D)))
    s_pad = jnp.pad(jnp.asarray(scale, jnp.float32), ((0, 0), (0, D_pad - D)))
    eye_k = jnp.eye(k, dtype=jnp.float32)
    w_blk = jnp.kron(eye_k, w_pad.T).astype(z.dtype)   # (Dp, k)
    s_blk = jnp.kron(eye_k, s_pad).astype(z.dtype)     # (k, Dp)
    bias2d = jnp.asarray(bias, jnp.float32).reshape(1, 1)

    buf_budget, vmem_limit = _vmem_plan()
    if tile_b is None:
        tile_b = _choose_tile_b(Bp, Dp, zp.dtype.itemsize, buf_budget)
    else:
        tile_b = max(1, min(int(tile_b), Bp))
        if tile_b < Bp:
            tile_b = max(8, (tile_b // 8) * 8)
    grid = (pl.cdiv(Bp, tile_b),)

    cost = pl.CostEstimate(
        flops=int(4 * Bp * Dp * k),                    # two tiny matmuls
        transcendentals=int(Bp * k),                   # tanh
        bytes_accessed=int(2 * Bp * Dp * zp.dtype.itemsize),
    )

    out = pl.pallas_call(
        planar_flow_kernel,
        out_shape=jax.ShapeDtypeStruct((Bp, Dp), z.dtype),
        grid_spec=pltpu.PrefetchScalarGridSpec(
            num_scalar_prefetch=0,
            grid=grid,
            in_specs=[
                pl.BlockSpec(memory_space=pltpu.SMEM),          # bias (1, 1)
                pl.BlockSpec((tile_b, Dp), lambda i: (i, 0)),   # packed z tile
                pl.BlockSpec((Dp, k), lambda i: (0, 0)),        # W_blk (resident)
                pl.BlockSpec((k, Dp), lambda i: (0, 0)),        # S_blk (resident)
            ],
            out_specs=pl.BlockSpec((tile_b, Dp), lambda i: (i, 0)),
        ),
        compiler_params=pltpu.CompilerParams(
            dimension_semantics=("parallel",),
            vmem_limit_bytes=vmem_limit,
        ),
        cost_estimate=cost,
    )(bias2d, zp, w_blk, s_blk)

    out = out.reshape(B_pad, D_pad)
    if (B_pad, D_pad) != (B, D):
        out = out[:B, :D]
    return out


def planar_flow_ref(z, weight, scale, bias):
    psi = jnp.tanh(z @ weight.T + bias)   # (B, 1)
    return z + scale * psi


if __name__ == "__main__":
    key = jax.random.PRNGKey(0)
    ks = jax.random.split(key, 8)

    # Tolerance accounts for MXU accumulation order / pass decomposition; the
    # update term itself is O(1e-2), so this still catches real bugs.
    ATOL, RTOL = 1e-4, 1e-4

    # --- Case 1: small shape consistent with the module (B=8, latent_dim=32) ---
    latent_dim = 32
    weight = jax.random.uniform(ks[0], (1, latent_dim), jnp.float32, -0.01, 0.01)
    scale = jax.random.uniform(ks[1], (1, latent_dim), jnp.float32, -0.01, 0.01)
    bias = jax.random.uniform(ks[2], (1,), jnp.float32, -0.01, 0.01)

    B = 8
    z = jax.random.normal(ks[3], (B, latent_dim), jnp.float32)
    out = jax.block_until_ready(planar_flow(z, weight, scale, bias))
    ref = planar_flow_ref(z, weight, scale, bias)
    assert out.shape == (B, latent_dim)
    assert jnp.allclose(out, ref, atol=ATOL, rtol=RTOL), "mismatch vs reference"

    # --- Case 2: multi-step grid, lane-packed path (forced small tile) ---
    B2 = 512
    z2 = jax.random.normal(ks[4], (B2, latent_dim), jnp.float32)
    out2 = jax.block_until_ready(planar_flow(z2, weight, scale, bias, tile_b=32))
    ref2 = planar_flow_ref(z2, weight, scale, bias)
    assert jnp.allclose(out2, ref2, atol=ATOL, rtol=RTOL), "mismatch vs reference (tiled)"

    # --- Case 3: padded path (128 % D != 0, ragged B) + auto multi-step grid ---
    D3, B3 = 48, 21
    w3 = jax.random.uniform(ks[5], (1, D3), jnp.float32, -0.01, 0.01)
    s3 = jax.random.uniform(ks[6], (1, D3), jnp.float32, -0.01, 0.01)
    z3 = jax.random.normal(ks[7], (B3, D3), jnp.float32)
    out3 = jax.block_until_ready(planar_flow(z3, w3, s3, bias))
    ref3 = planar_flow_ref(z3, w3, s3, bias)
    assert out3.shape == (B3, D3)
    assert jnp.allclose(out3, ref3, atol=ATOL, rtol=RTOL), "mismatch vs reference (padded)"

    print("KERNEL_OK")
</pallas_src>

<mosaic_0001>
module attributes {stable_mosaic.version = 11 : i64} {
  func.func @planar_flow_kernel(%arg0: i32, %arg1: memref<1x1xf32, #tpu.memory_space<smem>>, %arg2: memref<2x128xf32, #tpu.memory_space<vmem>>, %arg3: memref<128x4xf32, #tpu.memory_space<vmem>>, %arg4: memref<4x128xf32, #tpu.memory_space<vmem>>, %arg5: memref<2x128xf32, #tpu.memory_space<vmem>>) attributes {dimension_semantics = [#tpu.dimension_semantics<parallel>], iteration_bounds = array<i64: 1>, scalar_prefetch = 0 : i64, scratch_operands = 0 : i64, tpu.core_type = #tpu.core_type<tc>, window_params = [{transform_indices = @transform_0, window_bounds = array<i64: 1, 1>}, {transform_indices = @transform_1, window_bounds = array<i64: 2, 128>}, {pipeline_mode = #tpu.pipeline_mode<synchronous>, transform_indices = @transform_2, window_bounds = array<i64: 128, 4>}, {pipeline_mode = #tpu.pipeline_mode<synchronous>, transform_indices = @transform_3, window_bounds = array<i64: 4, 128>}, {transform_indices = @transform_4, window_bounds = array<i64: 2, 128>}]} {
    %c0 = arith.constant 0 : index
    %c0_0 = arith.constant 0 : index
    %0 = vector.load %arg2[%c0, %c0_0] : memref<2x128xf32, #tpu.memory_space<vmem>>, vector<2x128xf32>
    %c0_1 = arith.constant 0 : index
    %c0_2 = arith.constant 0 : index
    %1 = memref.load %arg1[%c0_1, %c0_2] : memref<1x1xf32, #tpu.memory_space<smem>>
    %c0_3 = arith.constant 0 : index
    %c0_4 = arith.constant 0 : index
    %2 = vector.load %arg3[%c0_3, %c0_4] : memref<128x4xf32, #tpu.memory_space<vmem>>, vector<128x4xf32>
    %cst = arith.constant dense<0.000000e+00> : vector<2x4xf32>
    %3 = tpu.matmul %0, %2, %cst {dimension_numbers = #tpu.dot_dimension_numbers<[1], [0], [0], [1], [0, 0, 1, 1], [], []>} : vector<2x128xf32>, vector<128x4xf32>, vector<2x4xf32> -> vector<2x4xf32>
    %4 = vector.broadcast %1 : f32 to vector<2x4xf32>
    %5 = arith.addf %3, %4 : vector<2x4xf32>
    %6 = math.tanh %5 : vector<2x4xf32>
    %c0_5 = arith.constant 0 : index
    %c0_6 = arith.constant 0 : index
    %7 = vector.load %arg4[%c0_5, %c0_6] : memref<4x128xf32, #tpu.memory_space<vmem>>, vector<4x128xf32>
    %cst_7 = arith.constant dense<0.000000e+00> : vector<2x128xf32>
    %8 = tpu.matmul %6, %7, %cst_7 {dimension_numbers = #tpu.dot_dimension_numbers<[1], [0], [0], [1], [0, 0, 1, 1], [], []>} : vector<2x4xf32>, vector<4x128xf32>, vector<2x128xf32> -> vector<2x128xf32>
    %9 = arith.addf %0, %8 : vector<2x128xf32>
    %c0_8 = arith.constant 0 : index
    %c0_9 = arith.constant 0 : index
    %10 = vector.load %arg5[%c0_8, %c0_9] : memref<2x128xf32, #tpu.memory_space<vmem>>, vector<2x128xf32>
    tpu.vector_store %arg5[%c0_8, %c0_9], %9 {strides = array<i32>} : memref<2x128xf32, #tpu.memory_space<vmem>>, vector<2x128xf32>,
    return
  }
  func.func @transform_0(%arg0: i32) -> (i32, i32) {
    %c0_i32 = arith.constant 0 : i32
    %c0_i32_0 = arith.constant 0 : i32
    %c0_i32_1 = arith.constant 0 : i32
    return %c0_i32, %c0_i32_0 : i32, i32
  }
  func.func @transform_1(%arg0: i32) -> (i32, i32) {
    %c0_i32 = arith.constant 0 : i32
    %c0_i32_0 = arith.constant 0 : i32
    return %arg0, %c0_i32 : i32, i32
  }
  func.func @transform_2(%arg0: i32) -> (i32, i32) {
    %c0_i32 = arith.constant 0 : i32
    %c0_i32_0 = arith.constant 0 : i32
    %c0_i32_1 = arith.constant 0 : i32
    return %c0_i32, %c0_i32_0 : i32, i32
  }
  func.func @transform_3(%arg0: i32) -> (i32, i32) {
    %c0_i32 = arith.constant 0 : i32
    %c0_i32_0 = arith.constant 0 : i32
    %c0_i32_1 = arith.constant 0 : i32
    return %c0_i32, %c0_i32_0 : i32, i32
  }
  func.func @transform_4(%arg0: i32) -> (i32, i32) {
    %c0_i32 = arith.constant 0 : i32
    %c0_i32_0 = arith.constant 0 : i32
    return %arg0, %c0_i32 : i32, i32
  }
}

</mosaic_0001>

<llo_original>
// kernel: tpu_custom_call.1
$region0: #{tpu_custom_call.1}
  #allocation0 [shape = 'u32[]', space=smem, size = 0x4, offset = 0x4, fixed_abs, tag = 'smem constant byte address 0x4 - core index']
  #allocation1 [shape = 'u32[72,128]{1,0:T(1,128)}', space=vmem, size = 0x9000, scoped, tag = 'internal scratch']
  #allocation2 [shape = 'f32[1,1]{1,0:T(1,128)S(6)}', space=smem, size = 0x200, scoped, tag = 'scoped memory for tpu_custom_call.1']
  %s0 = inlined_call_operand.<no memory space> [shape: f32[1,1], index: 0, kind: input, shape index: {}]
  %s1 = inlined_call_operand.vmem [shape: f32[2,128], index: 1, kind: input, shape index: {}]
  %s2 = inlined_call_operand.vmem [shape: f32[128,4], index: 2, kind: input, shape index: {}]
  %s3 = inlined_call_operand.vmem [shape: f32[4,128], index: 3, kind: input, shape index: {}]
  %s4 = inlined_call_operand.hbm [shape: f32[2,128], index: 4, kind: output, shape index: {}]
  %s5 = sld [smem:[#allocation0]]
  $region26: #{tpu_custom_call.1} parent=0
    _
  %s7 = ssub.s32 1, %s5
  %s8 = scalar_select 0, %s7, %s5
  %9 = sst [smem:[#allocation2]] %s0
  $region1: #{tpu_custom_call.1} parent=0
    #allocation3 [shape = 'u8[1024]{0}', space=vmem, size = 0x400, scoped, tag = 'output window, operand 0, single buffered']
    #allocation4 [shape = 's32[1]{0}', space=sflag, size = 0x4, scoped, tag = 'scoped memory for tpu_custom_call.1']
    %10 = vsyncpa [#allocation4], 0
    // Predicated region
    $region2: #{tpu_custom_call.1} parent=1 // pred_check
      _
    $region3: #{tpu_custom_call.1} parent=1 // pred_check_branch
      %12 = sbr.rel (0) target = $region5
    $region4: #{tpu_custom_call.1} parent=1 // pred_region
      _
    $region5: #{tpu_custom_call.1} parent=1 // pred_fallthru
      _
    // Predicated region
    $region6: #{tpu_custom_call.1} parent=1 // pred_check
      _
    $region7: #{tpu_custom_call.1} parent=1 // pred_check_branch
      %14 = sbr.rel (0) target = $region9
    $region8: #{tpu_custom_call.1} parent=1 // pred_region
      _
    $region9: #{tpu_custom_call.1} parent=1 // pred_fallthru
      _
    // Predicated region
    $region10: #{tpu_custom_call.1} parent=1 // pred_check
      _
    $region11: #{tpu_custom_call.1} parent=1 // pred_check_branch
      %16 = sbr.rel (0) target = $region13
    $region12: #{tpu_custom_call.1} parent=1 // pred_region
      _
    $region13: #{tpu_custom_call.1} parent=1 // pred_fallthru
      _
    // Predicated region
    $region14: #{tpu_custom_call.1} parent=1 // pred_check
      _
    $region15: #{tpu_custom_call.1} parent=1 // pred_check_branch
      %18 = sbr.rel (0) target = $region17
    $region16: #{tpu_custom_call.1} parent=1 // pred_region
      _
    $region17: #{tpu_custom_call.1} parent=1 // pred_fallthru
      _
    %v19 = vld [vmem:[%s1] sm:$0x3]
    %s20 = sld [smem:[#allocation2]]
    %v21 = vld [vmem:[%s2] sm:$0xff]
    %v22 = vld [vmem:[%s2 + $0x8] sm:$0xff]
    %v23 = vld [vmem:[%s2 + $0x10] sm:$0xff]
    %v24 = vld [vmem:[%s2 + $0x18] sm:$0xff]
    %v25 = vld [vmem:[%s2 + $0x20] sm:$0xff]
    %v26 = vld [vmem:[%s2 + $0x28] sm:$0xff]
    %v27 = vld [vmem:[%s2 + $0x30] sm:$0xff]
    %v28 = vld [vmem:[%s2 + $0x38] sm:$0xff]
    %v29 = vld [vmem:[%s2 + $0x40] sm:$0xff]
    %v30 = vld [vmem:[%s2 + $0x48] sm:$0xff]
    %v31 = vld [vmem:[%s2 + $0x50] sm:$0xff]
    %v32 = vld [vmem:[%s2 + $0x58] sm:$0xff]
    %v33 = vld [vmem:[%s2 + $0x60] sm:$0xff]
    %v34 = vld [vmem:[%s2 + $0x68] sm:$0xff]
    %v35 = vld [vmem:[%s2 + $0x70] sm:$0xff]
    %v36 = vld [vmem:[%s2 + $0x78] sm:$0xff]
    %v37 = vstv %s20
    %38 = vmatpush.msra.mxu0 %v36
    %39 = vmatpush.msra.mxu0 %v35
    %40 = vmatpush.msra.mxu0 %v34
    %41 = vmatpush.msra.mxu0 %v33
    %42 = vmatpush.msra.mxu0 %v32
    %43 = vmatpush.msra.mxu0 %v31
    %44 = vmatpush.msra.mxu0 %v30
    %45 = vmatpush.msra.mxu0 %v29
    %46 = vmatpush.msra.mxu0 %v28
    %47 = vmatpush.msra.mxu0 %v27
    %48 = vmatpush.msra.mxu0 %v26
    %49 = vmatpush.msra.mxu0 %v25
    %50 = vmatpush.msra.mxu0 %v24
    %51 = vmatpush.msra.mxu0 %v23
    %52 = vmatpush.msra.mxu0 %v22
    %53 = vmatpush.msra.mxu0 %v21
    %54 = vmatmul.f32.gmra.mxu0 %v19
    %v55 = vpop.f32.mrf.mxu0
    %v56 = vadd.f32 %v37, %v55
    %57 = vdwg.mxu0
    %v58 = vtanh.pop %v56
    %v59 = vld [vmem:[%s3] sm:$0xf]
    %vm60 = vcmask 31744
    %v62 = vsel %vm60, %v58, 0
    %vm64 = vcmask 1043456
    %v66 = vsel %vm64, %v59, 0
    %68 = vmatpush.msra.mxu0 0.0
    %69 = vmatpush.msra.mxu0 0.0
    %70 = vmatpush.msra.mxu0 0.0
    %71 = vmatpush.msra.mxu0 0.0
    %72 = vmatpush.msra.mxu0 0.0
    %73 = vmatpush.msra.mxu0 0.0
    %74 = vmatpush.msra.mxu0 0.0
    %75 = vmatpush.msra.mxu0 0.0
    %76 = vmatpush.msra.mxu0 0.0
    %77 = vmatpush.msra.mxu0 0.0
    %78 = vmatpush.msra.mxu0 0.0
    %79 = vmatpush.msra.mxu0 0.0
    %80 = vmatpush.msra.mxu0 0.0
    %81 = vmatpush.msra.mxu0 0.0
    %82 = vmatpush.msra.mxu0 0.0
    %83 = vmatpush.msra.mxu0 %v66
    %84 = vmatmul.f32.gmra.mxu0 %v62
    %v85 = vpop.f32.mrf.mxu0
    %v86 = vadd.f32 0.0, %v85
    %87 = vdwg.mxu0
    %v88 = vadd.f32 %v19, %v86
    %89 = vst [vmem:[#allocation3] sm:$0x3] %v88
    // Predicated region
    $region18: #{tpu_custom_call.1} parent=1 // pred_check
      _
    $region19: #{tpu_custom_call.1} parent=1 // pred_check_branch
      %91 = sbr.rel (0) target = $region21
    $region20: #{tpu_custom_call.1} parent=1 // pred_region
      %93 = vsyncadd [#allocation4], 0
      %s95 = sshll.u32 [#allocation3], 4
      %s96 = int_to_ptr.vmem [resolvable:$true] %s95
      %s97 = sshll.u32 %s4, 4
      %s98 = int_to_ptr.hbm [resolvable:$true] %s97
      %100 = dma.vmem_to_hbm [thread:$0]  %s96, 32, %s98, [#allocation4]
    $region21: #{tpu_custom_call.1} parent=1 // pred_fallthru
      _
    // Predicated region
    $region22: #{tpu_custom_call.1} parent=1 // pred_check
      _
    $region23: #{tpu_custom_call.1} parent=1 // pred_check_branch
      %102 = sbr.rel (0) target = $region25
    $region24: #{tpu_custom_call.1} parent=1 // pred_region
      %104 = dma.done [#allocation4], 32
    $region25: #{tpu_custom_call.1} parent=1 // pred_fallthru
      _
    %105 = vsyncpa [#allocation4], 1

</llo_original>
